<compile_context>
chip_gen: v7x
topology: tpu7x:2x2x1
jax: 0.10.0
libtpu: 0.0.40
codegen_flags: <defaults>
</compile_context>

<pallas_src>
import functools

import jax
import jax.numpy as jnp
import numpy as np
from jax import lax
from jax.experimental import pallas as pl
from jax.experimental.pallas import tpu as pltpu

_MATMUL_DTYPE = jnp.bfloat16     # MXU-native operand dtype; accumulation is f32
_VMEM_LIMIT = 32 * 1024 * 1024   # generous; working set here is < 1 MiB


# ---------------------------------------------------------------------------
# wrapper-side weight folding (runs once per call, outside the kernel)
# ---------------------------------------------------------------------------
def _fold_conv3x3_weights(w_hwio, W):
    """(3,3,Cin,Cout) HWIO -> (3*W*Cin, W*Cout) banded RHS.

    The W zero-padding is folded into the band (clipped at the image
    boundary), so the kernel's LHS block for kernel-row kh is exactly
    W*Cin lanes wide:
      rhs[kh*W*Cin + wi*Cin + ci, wo*Cout + co] = w[kh, kw, ci, co]
        where kw = wi - wo + 1, kept only if kw in {0,1,2}.
    """
    Cin, Cout = w_hwio.shape[2], w_hwio.shape[3]
    wi = jnp.arange(W)[:, None]
    wo = jnp.arange(W)[None, :]
    taps = []
    for kh in range(3):
        m = jnp.zeros((W, Cin, W, Cout), w_hwio.dtype)
        for kw in range(3):
            sel = (wi == wo + kw - 1).astype(w_hwio.dtype)   # (W, W) 0/1 band
            m = m + sel[:, None, :, None] * w_hwio[kh, kw][None, :, None, :]
        taps.append(m.reshape(W * Cin, W * Cout))
    return jnp.concatenate(taps, axis=0)                     # (3*W*Cin, W*Cout)


# ---------------------------------------------------------------------------
# fused kernel (whole batch in one step)
# ---------------------------------------------------------------------------
def _basic_block_kernel(x_ref, w1_ref, w2_ref, g1_ref, b1_ref, g2_ref, b2_ref,
                        o_ref, *, N, C, H, W, eps):
    WC = W * C
    count = float(N * H * W)
    x_f32 = x_ref[...]                                   # (N, H, WC) identity

    def conv(a_f32, w_ref_):
        """3x3 'same' conv as ONE MXU matmul, M=N*H, K=3*WC, f32 accumulation."""
        zr = jnp.zeros((N, 1, WC), jnp.float32)
        ap = jnp.concatenate([zr, a_f32, zr], axis=1)     # 1-row H halo only
        lhs = jnp.concatenate(                            # (N, H, 3*WC)
            [ap[:, 0:H], ap[:, 1:H + 1], ap[:, 2:H + 2]], axis=2)
        lhs = lhs.reshape(N * H, 3 * WC).astype(_MATMUL_DTYPE)  # single bf16 cast
        return jnp.dot(lhs, w_ref_[...],
                       preferred_element_type=jnp.float32)      # (N*H, WC) f32

    def bn_scale_shift(y, g_lane, b_lane):
        """Training-mode BN over (N,H,W): fused per-lane scale/shift (1, WC).

        Per-channel sums are obtained by a circular lane roll-tree in steps of
        C (every lane ends up holding its own channel's total), keeping all
        accumulation in exact f32 and avoiding lane<->sublane reshapes.
        """
        sums = jnp.concatenate(
            [jnp.sum(y, axis=0, keepdims=True),
             jnp.sum(y * y, axis=0, keepdims=True)], axis=0)    # (2, WC)
        shift = C
        while shift < WC:                                       # log2(W) steps
            sums = sums + pltpu.roll(sums, shift, 1)
            shift *= 2
        mean = sums[0:1, :] / count
        var = jnp.maximum(sums[1:2, :] / count - mean * mean, 0.0)  # biased
        scale = g_lane * lax.rsqrt(var + eps)
        offset = b_lane - mean * scale
        return scale, offset

    # conv1 -> bn1 -> relu
    y1 = conv(x_f32, w1_ref)
    sc1, sh1 = bn_scale_shift(y1, g1_ref[...], b1_ref[...])
    a1 = jnp.maximum(y1 * sc1 + sh1, 0.0)                   # (N*H, WC)

    # conv2 -> bn2 -> residual -> relu
    y2 = conv(a1.reshape(N, H, WC), w2_ref)
    sc2, sh2 = bn_scale_shift(y2, g2_ref[...], b2_ref[...])
    out = y2 * sc2 + sh2 + x_f32.reshape(N * H, WC)
    o_ref[...] = jnp.maximum(out, 0.0).reshape(N, H, WC).astype(o_ref.dtype)


# ---------------------------------------------------------------------------
# public entry point (PyTorch NCHW / OIHW layouts in and out)
# ---------------------------------------------------------------------------
@functools.partial(jax.jit, static_argnames=("eps",))
def basic_block(x_nchw, w1_oihw, g1, b1, w2_oihw, g2, b2, eps=1e-5):
    N, C, H, W = x_nchw.shape
    P = w1_oihw.shape[0]
    assert P == C and w1_oihw.shape == (P, C, 3, 3) and w2_oihw.shape == (P, P, 3, 3)
    assert W & (W - 1) == 0, "roll-tree channel reduction assumes W is a power of 2"
    # TODO(synk): stride>1 / downsample branch not implemented (module defaults).
    WC = W * C

    # NCHW -> W-folded channels-last (N, H, W*C), lane index = w*C + c.
    # TODO(synk): for production shapes accept channels-last inputs directly.
    xf = jnp.transpose(x_nchw, (0, 2, 3, 1)).reshape(N, H, WC)

    # Banded bf16 conv weights with the W padding folded in (K = 3*W*C).
    w1f = _fold_conv3x3_weights(
        jnp.transpose(w1_oihw, (2, 3, 1, 0)).astype(_MATMUL_DTYPE), W)
    w2f = _fold_conv3x3_weights(
        jnp.transpose(w2_oihw, (2, 3, 1, 0)).astype(_MATMUL_DTYPE), W)

    # Per-lane gamma/beta (lane = w*C + c  ->  tile the (C,) vectors W times).
    g1l = jnp.tile(g1.astype(jnp.float32), W).reshape(1, WC)
    b1l = jnp.tile(b1.astype(jnp.float32), W).reshape(1, WC)
    g2l = jnp.tile(g2.astype(jnp.float32), W).reshape(1, WC)
    b2l = jnp.tile(b2.astype(jnp.float32), W).reshape(1, WC)

    out = pl.pallas_call(
        functools.partial(_basic_block_kernel, N=N, C=C, H=H, W=W, eps=eps),
        out_shape=jax.ShapeDtypeStruct((N, H, WC), x_nchw.dtype),
        compiler_params=pltpu.CompilerParams(vmem_limit_bytes=_VMEM_LIMIT),
    )(xf, w1f, w2f, g1l, b1l, g2l, b2l)

    return jnp.transpose(out.reshape(N, H, W, C), (0, 3, 1, 2))


# ---------------------------------------------------------------------------
# pure-JAX reference (NCHW), mirroring the PyTorch module
# ---------------------------------------------------------------------------
def basic_block_ref(x, w1, g1, b1, w2, g2, b2, eps=1e-5,
                    matmul_dtype=jnp.float32):
    def conv(y, w):
        return lax.conv_general_dilated(
            y.astype(matmul_dtype), w.astype(matmul_dtype),
            window_strides=(1, 1), padding=((1, 1), (1, 1)),
            dimension_numbers=("NCHW", "OIHW", "NCHW"),
            preferred_element_type=jnp.float32)

    def bn(y, g, b):
        mean = jnp.mean(y, axis=(0, 2, 3), keepdims=True)
        var = jnp.mean((y - mean) ** 2, axis=(0, 2, 3), keepdims=True)
        yhat = (y - mean) * lax.rsqrt(var + eps)
        return yhat * g.reshape(1, -1, 1, 1) + b.reshape(1, -1, 1, 1)

    out = jnp.maximum(bn(conv(x, w1), g1, b1), 0.0)
    out = bn(conv(out, w2), g2, b2) + x
    return jnp.maximum(out, 0.0)


if __name__ == "__main__":
    N, C, H, W = 2, 8, 16, 16            # inplanes == planes == 8, stride=1
    key = jax.random.PRNGKey(0)
    kx, k1, k2, kg1, kb1, kg2, kb2 = jax.random.split(key, 7)

    x = jax.random.normal(kx, (N, C, H, W), jnp.float32)
    w1 = 0.1 * jax.random.normal(k1, (C, C, 3, 3), jnp.float32)   # OIHW
    w2 = 0.1 * jax.random.normal(k2, (C, C, 3, 3), jnp.float32)
    gamma1 = 1.0 + 0.1 * jax.random.normal(kg1, (C,), jnp.float32)
    beta1 = 0.1 * jax.random.normal(kb1, (C,), jnp.float32)
    gamma2 = 1.0 + 0.1 * jax.random.normal(kg2, (C,), jnp.float32)
    beta2 = 0.1 * jax.random.normal(kb2, (C,), jnp.float32)

    out = jax.block_until_ready(
        basic_block(x, w1, gamma1, beta1, w2, gamma2, beta2))
    assert out.shape == (N, C, H, W)

    # Reference mirroring the kernel's numerics (bf16 MXU operands, f32
    # accumulation) -> tight agreement.
    ref_bf16 = jax.block_until_ready(
        basic_block_ref(x, w1, gamma1, beta1, w2, gamma2, beta2,
                        matmul_dtype=jnp.bfloat16))
    np.testing.assert_allclose(np.asarray(out), np.asarray(ref_bf16),
                               rtol=5e-3, atol=5e-3)

    # Full-fp32 semantic reference (the PyTorch module in fp32); the loose
    # tolerance only accounts for the intentional bf16 matmul operands.
    ref_f32 = jax.block_until_ready(
        basic_block_ref(x, w1, gamma1, beta1, w2, gamma2, beta2))
    np.testing.assert_allclose(np.asarray(out), np.asarray(ref_f32),
                               rtol=1e-1, atol=1e-1)

    print("KERNEL_OK")
</pallas_src>

<mosaic_0001>
module attributes {stable_mosaic.version = 11 : i64} {
  func.func @_basic_block_kernel(%arg0: memref<2x16x128xf32, #tpu.memory_space<vmem>>, %arg1: memref<384x128xbf16, #tpu.memory_space<vmem>>, %arg2: memref<384x128xbf16, #tpu.memory_space<vmem>>, %arg3: memref<1x128xf32, #tpu.memory_space<vmem>>, %arg4: memref<1x128xf32, #tpu.memory_space<vmem>>, %arg5: memref<1x128xf32, #tpu.memory_space<vmem>>, %arg6: memref<1x128xf32, #tpu.memory_space<vmem>>, %arg7: memref<2x16x128xf32, #tpu.memory_space<vmem>>) attributes {dimension_semantics = [], scalar_prefetch = 0 : i64, scratch_operands = 0 : i64, tpu.core_type = #tpu.core_type<tc>} {
    %c0 = arith.constant 0 : index
    %c0_0 = arith.constant 0 : index
    %c0_1 = arith.constant 0 : index
    %0 = vector.load %arg0[%c0, %c0_0, %c0_1] : memref<2x16x128xf32, #tpu.memory_space<vmem>>, vector<2x16x128xf32>
    %cst = arith.constant 0.000000e+00 : f32
    %1 = vector.broadcast %cst : f32 to vector<2x1x128xf32>
    %2 = tpu.concatenate %1, %0, %1 in 1 : vector<2x1x128xf32>, vector<2x16x128xf32>, vector<2x1x128xf32> -> vector<2x18x128xf32>
    %3 = vector.extract_strided_slice %2 {offsets = [0, 0, 0], sizes = [2, 16, 128], strides = [1, 1, 1]} : vector<2x18x128xf32> to vector<2x16x128xf32>
    %4 = vector.extract_strided_slice %2 {offsets = [0, 1, 0], sizes = [2, 16, 128], strides = [1, 1, 1]} : vector<2x18x128xf32> to vector<2x16x128xf32>
    %5 = vector.extract_strided_slice %2 {offsets = [0, 2, 0], sizes = [2, 16, 128], strides = [1, 1, 1]} : vector<2x18x128xf32> to vector<2x16x128xf32>
    %6 = tpu.concatenate %3, %4, %5 in 2 : vector<2x16x128xf32>, vector<2x16x128xf32>, vector<2x16x128xf32> -> vector<2x16x384xf32>
    %7 = vector.shape_cast %6 : vector<2x16x384xf32> to vector<32x384xf32>
    %8 = arith.truncf %7 : vector<32x384xf32> to vector<32x384xbf16>
    %c0_2 = arith.constant 0 : index
    %c0_3 = arith.constant 0 : index
    %9 = vector.load %arg1[%c0_2, %c0_3] : memref<384x128xbf16, #tpu.memory_space<vmem>>, vector<384x128xbf16>
    %cst_4 = arith.constant dense<0.000000e+00> : vector<32x128xf32>
    %10 = tpu.matmul %8, %9, %cst_4 {dimension_numbers = #tpu.dot_dimension_numbers<[1], [0], [0], [1], [0, 0, 1, 1], [], []>} : vector<32x384xbf16>, vector<384x128xbf16>, vector<32x128xf32> -> vector<32x128xf32>
    %c0_5 = arith.constant 0 : index
    %c0_6 = arith.constant 0 : index
    %11 = vector.load %arg3[%c0_5, %c0_6] : memref<1x128xf32, #tpu.memory_space<vmem>>, vector<1x128xf32>
    %c0_7 = arith.constant 0 : index
    %c0_8 = arith.constant 0 : index
    %12 = vector.load %arg4[%c0_7, %c0_8] : memref<1x128xf32, #tpu.memory_space<vmem>>, vector<1x128xf32>
    %cst_9 = arith.constant dense<0.000000e+00> : vector<128xf32>
    %13 = vector.multi_reduction <add>, %10, %cst_9 [0] : vector<32x128xf32> to vector<128xf32>
    %14 = vector.shape_cast %13 : vector<128xf32> to vector<1x128xf32>
    %15 = arith.mulf %10, %10 : vector<32x128xf32>
    %cst_10 = arith.constant dense<0.000000e+00> : vector<128xf32>
    %16 = vector.multi_reduction <add>, %15, %cst_10 [0] : vector<32x128xf32> to vector<128xf32>
    %17 = vector.shape_cast %16 : vector<128xf32> to vector<1x128xf32>
    %18 = tpu.concatenate %14, %17 in 0 : vector<1x128xf32>, vector<1x128xf32> -> vector<2x128xf32>
    %c8_i32 = arith.constant 8 : i32
    %19 = tpu.dynamic_rotate %18 by %c8_i32 dim 1 : vector<2x128xf32>, i32 -> vector<2x128xf32>
    %20 = arith.addf %18, %19 : vector<2x128xf32>
    %c16_i32 = arith.constant 16 : i32
    %21 = tpu.dynamic_rotate %20 by %c16_i32 dim 1 : vector<2x128xf32>, i32 -> vector<2x128xf32>
    %22 = arith.addf %20, %21 : vector<2x128xf32>
    %c32_i32 = arith.constant 32 : i32
    %23 = tpu.dynamic_rotate %22 by %c32_i32 dim 1 : vector<2x128xf32>, i32 -> vector<2x128xf32>
    %24 = arith.addf %22, %23 : vector<2x128xf32>
    %c64_i32 = arith.constant 64 : i32
    %25 = tpu.dynamic_rotate %24 by %c64_i32 dim 1 : vector<2x128xf32>, i32 -> vector<2x128xf32>
    %26 = arith.addf %24, %25 : vector<2x128xf32>
    %27 = vector.extract_strided_slice %26 {offsets = [0, 0], sizes = [1, 128], strides = [1, 1]} : vector<2x128xf32> to vector<1x128xf32>
    %cst_11 = arith.constant 5.120000e+02 : f32
    %28 = vector.broadcast %cst_11 : f32 to vector<1x128xf32>
    %29 = arith.divf %27, %28 : vector<1x128xf32>
    %30 = vector.extract_strided_slice %26 {offsets = [1, 0], sizes = [1, 128], strides = [1, 1]} : vector<2x128xf32> to vector<1x128xf32>
    %cst_12 = arith.constant 5.120000e+02 : f32
    %31 = vector.broadcast %cst_12 : f32 to vector<1x128xf32>
    %32 = arith.divf %30, %31 : vector<1x128xf32>
    %33 = arith.mulf %29, %29 : vector<1x128xf32>
    %34 = arith.subf %32, %33 : vector<1x128xf32>
    %cst_13 = arith.constant 0.000000e+00 : f32
    %35 = vector.broadcast %cst_13 : f32 to vector<1x128xf32>
    %36 = arith.maximumf %34, %35 : vector<1x128xf32>
    %cst_14 = arith.constant 9.99999974E-6 : f32
    %37 = vector.broadcast %cst_14 : f32 to vector<1x128xf32>
    %38 = arith.addf %36, %37 : vector<1x128xf32>
    %39 = math.rsqrt %38 : vector<1x128xf32>
    %40 = arith.mulf %11, %39 : vector<1x128xf32>
    %41 = arith.mulf %29, %40 : vector<1x128xf32>
    %42 = arith.subf %12, %41 : vector<1x128xf32>
    %43 = vector.broadcast %40 : vector<1x128xf32> to vector<32x128xf32>
    %44 = arith.mulf %10, %43 : vector<32x128xf32>
    %45 = vector.broadcast %42 : vector<1x128xf32> to vector<32x128xf32>
    %46 = arith.addf %44, %45 : vector<32x128xf32>
    %cst_15 = arith.constant 0.000000e+00 : f32
    %47 = vector.broadcast %cst_15 : f32 to vector<32x128xf32>
    %48 = arith.maximumf %46, %47 : vector<32x128xf32>
    %49 = vector.shape_cast %48 : vector<32x128xf32> to vector<2x16x128xf32>
    %cst_16 = arith.constant 0.000000e+00 : f32
    %50 = vector.broadcast %cst_16 : f32 to vector<2x1x128xf32>
    %51 = tpu.concatenate %50, %49, %50 in 1 : vector<2x1x128xf32>, vector<2x16x128xf32>, vector<2x1x128xf32> -> vector<2x18x128xf32>
    %52 = vector.extract_strided_slice %51 {offsets = [0, 0, 0], sizes = [2, 16, 128], strides = [1, 1, 1]} : vector<2x18x128xf32> to vector<2x16x128xf32>
    %53 = vector.extract_strided_slice %51 {offsets = [0, 1, 0], sizes = [2, 16, 128], strides = [1, 1, 1]} : vector<2x18x128xf32> to vector<2x16x128xf32>
    %54 = vector.extract_strided_slice %51 {offsets = [0, 2, 0], sizes = [2, 16, 128], strides = [1, 1, 1]} : vector<2x18x128xf32> to vector<2x16x128xf32>
    %55 = tpu.concatenate %52, %53, %54 in 2 : vector<2x16x128xf32>, vector<2x16x128xf32>, vector<2x16x128xf32> -> vector<2x16x384xf32>
    %56 = vector.shape_cast %55 : vector<2x16x384xf32> to vector<32x384xf32>
    %57 = arith.truncf %56 : vector<32x384xf32> to vector<32x384xbf16>
    %c0_17 = arith.constant 0 : index
    %c0_18 = arith.constant 0 : index
    %58 = vector.load %arg2[%c0_17, %c0_18] : memref<384x128xbf16, #tpu.memory_space<vmem>>, vector<384x128xbf16>
    %cst_19 = arith.constant dense<0.000000e+00> : vector<32x128xf32>
    %59 = tpu.matmul %57, %58, %cst_19 {dimension_numbers = #tpu.dot_dimension_numbers<[1], [0], [0], [1], [0, 0, 1, 1], [], []>} : vector<32x384xbf16>, vector<384x128xbf16>, vector<32x128xf32> -> vector<32x128xf32>
    %c0_20 = arith.constant 0 : index
    %c0_21 = arith.constant 0 : index
    %60 = vector.load %arg5[%c0_20, %c0_21] : memref<1x128xf32, #tpu.memory_space<vmem>>, vector<1x128xf32>
    %c0_22 = arith.constant 0 : index
    %c0_23 = arith.constant 0 : index
    %61 = vector.load %arg6[%c0_22, %c0_23] : memref<1x128xf32, #tpu.memory_space<vmem>>, vector<1x128xf32>
    %cst_24 = arith.constant dense<0.000000e+00> : vector<128xf32>
    %62 = vector.multi_reduction <add>, %59, %cst_24 [0] : vector<32x128xf32> to vector<128xf32>
    %63 = vector.shape_cast %62 : vector<128xf32> to vector<1x128xf32>
    %64 = arith.mulf %59, %59 : vector<32x128xf32>
    %cst_25 = arith.constant dense<0.000000e+00> : vector<128xf32>
    %65 = vector.multi_reduction <add>, %64, %cst_25 [0] : vector<32x128xf32> to vector<128xf32>
    %66 = vector.shape_cast %65 : vector<128xf32> to vector<1x128xf32>
    %67 = tpu.concatenate %63, %66 in 0 : vector<1x128xf32>, vector<1x128xf32> -> vector<2x128xf32>
    %c8_i32_26 = arith.constant 8 : i32
    %68 = tpu.dynamic_rotate %67 by %c8_i32_26 dim 1 : vector<2x128xf32>, i32 -> vector<2x128xf32>
    %69 = arith.addf %67, %68 : vector<2x128xf32>
    %c16_i32_27 = arith.constant 16 : i32
    %70 = tpu.dynamic_rotate %69 by %c16_i32_27 dim 1 : vector<2x128xf32>, i32 -> vector<2x128xf32>
    %71 = arith.addf %69, %70 : vector<2x128xf32>
    %c32_i32_28 = arith.constant 32 : i32
    %72 = tpu.dynamic_rotate %71 by %c32_i32_28 dim 1 : vector<2x128xf32>, i32 -> vector<2x128xf32>
    %73 = arith.addf %71, %72 : vector<2x128xf32>
    %c64_i32_29 = arith.constant 64 : i32
    %74 = tpu.dynamic_rotate %73 by %c64_i32_29 dim 1 : vector<2x128xf32>, i32 -> vector<2x128xf32>
    %75 = arith.addf %73, %74 : vector<2x128xf32>
    %76 = vector.extract_strided_slice %75 {offsets = [0, 0], sizes = [1, 128], strides = [1, 1]} : vector<2x128xf32> to vector<1x128xf32>
    %cst_30 = arith.constant 5.120000e+02 : f32
    %77 = vector.broadcast %cst_30 : f32 to vector<1x128xf32>
    %78 = arith.divf %76, %77 : vector<1x128xf32>
    %79 = vector.extract_strided_slice %75 {offsets = [1, 0], sizes = [1, 128], strides = [1, 1]} : vector<2x128xf32> to vector<1x128xf32>
    %cst_31 = arith.constant 5.120000e+02 : f32
    %80 = vector.broadcast %cst_31 : f32 to vector<1x128xf32>
    %81 = arith.divf %79, %80 : vector<1x128xf32>
    %82 = arith.mulf %78, %78 : vector<1x128xf32>
    %83 = arith.subf %81, %82 : vector<1x128xf32>
    %cst_32 = arith.constant 0.000000e+00 : f32
    %84 = vector.broadcast %cst_32 : f32 to vector<1x128xf32>
    %85 = arith.maximumf %83, %84 : vector<1x128xf32>
    %cst_33 = arith.constant 9.99999974E-6 : f32
    %86 = vector.broadcast %cst_33 : f32 to vector<1x128xf32>
    %87 = arith.addf %85, %86 : vector<1x128xf32>
    %88 = math.rsqrt %87 : vector<1x128xf32>
    %89 = arith.mulf %60, %88 : vector<1x128xf32>
    %90 = arith.mulf %78, %89 : vector<1x128xf32>
    %91 = arith.subf %61, %90 : vector<1x128xf32>
    %92 = vector.broadcast %89 : vector<1x128xf32> to vector<32x128xf32>
    %93 = arith.mulf %59, %92 : vector<32x128xf32>
    %94 = vector.broadcast %91 : vector<1x128xf32> to vector<32x128xf32>
    %95 = arith.addf %93, %94 : vector<32x128xf32>
    %96 = vector.shape_cast %0 : vector<2x16x128xf32> to vector<32x128xf32>
    %97 = arith.addf %95, %96 : vector<32x128xf32>
    %cst_34 = arith.constant 0.000000e+00 : f32
    %98 = vector.broadcast %cst_34 : f32 to vector<32x128xf32>
    %99 = arith.maximumf %97, %98 : vector<32x128xf32>
    %100 = vector.shape_cast %99 : vector<32x128xf32> to vector<2x16x128xf32>
    %c0_35 = arith.constant 0 : index
    %c0_36 = arith.constant 0 : index
    %c0_37 = arith.constant 0 : index
    %101 = vector.load %arg7[%c0_35, %c0_36, %c0_37] : memref<2x16x128xf32, #tpu.memory_space<vmem>>, vector<2x16x128xf32>
    tpu.vector_store %arg7[%c0_35, %c0_36, %c0_37], %100 {strides = array<i32>} : memref<2x16x128xf32, #tpu.memory_space<vmem>>, vector<2x16x128xf32>,
    return
  }
}

</mosaic_0001>

<llo_original>
// kernel: tile.23
$region0: #{tile.23}
  #allocation0 [shape = 's32[1]{0}', space=sflag, size = 0x4, scoped, tag = 'scoped memory for tile.23']
  %s0 = inlined_call_operand.vmem [shape: f32[8], index: 0, kind: input, shape index: {}]
  %s1 = inlined_call_operand.vmem [shape: f32[16,8], index: 1, kind: output, shape index: {}]
  // Predicated region
  $region2: #{tile.23} parent=0 // pred_check
    _
  $region3: #{tile.23} parent=0 // pred_check_branch
    %3 = sbr.rel (0) target = $region5
  $region4: #{tile.23} parent=0 // pred_region
    _
  $region5: #{tile.23} parent=0 // pred_fallthru
    _
  %v4 = vld [vmem:[%s0] ss:$0 sm:$0xff]
  %5 = vst [vmem:[%s1] sm:$0xff] %v4
  %s6 = scalar_lea.vmem %s1, 8
  %7 = vst [vmem:[%s6] sm:$0xff] %v4

// kernel: tile.24
$region0: #{tile.24}
  %s0 = inlined_call_operand.vmem [shape: f32[16,8], index: 0, kind: input, shape index: {}]
  %s1 = inlined_call_operand.vmem [shape: f32[1,128], index: 1, kind: output, shape index: {}]
  $region1: #{tile.24} parent=0
    #allocation0 [shape = 'u8[4096]{0}', space=vmem, size = 0x1000, scoped, tag = 'scoped mem for output reshape']
    %v2 = vld [vmem:[%s0] sm:$0x1]
    %vm3 = vcmask 64512
    %4 = vst.msk [vmem:[#allocation0] sm:$0x1] %vm3, %v2
    %s5 = scalar_lea.vmem %s0, 15
    %v6 = vld [vmem:[%s5] sm:$0x1]
    %7 = vrot.lane.b32.xlu0 %v6, 120
    %v8 = vpop.permute.xlu0 %7
    %vm9 = vcmask 1048512
    %10 = vst.msk [vmem:[#allocation0] sm:$0x1] %vm9, %v8
    %s11 = scalar_lea.vmem %s0, 14
    %v12 = vld [vmem:[%s11] sm:$0x1]
    %13 = vrot.lane.b32.xlu0 %v12, 112
    %v14 = vpop.permute.xlu0 %13
    %vm15 = vcmask 982912
    %16 = vst.msk [vmem:[#allocation0] sm:$0x1] %vm15, %v14
    %s17 = scalar_lea.vmem %s0, 13
    %v18 = vld [vmem:[%s17] sm:$0x1]
    %19 = vrot.lane.b32.xlu0 %v18, 104
    %v20 = vpop.permute.xlu0 %19
    %vm21 = vcmask 917312
    %22 = vst.msk [vmem:[#allocation0] sm:$0x1] %vm21, %v20
    %s23 = scalar_lea.vmem %s0, 12
    %v24 = vld [vmem:[%s23] sm:$0x1]
    %25 = vrot.lane.b32.xlu0 %v24, 96
    %v26 = vpop.permute.xlu0 %25
    %vm27 = vcmask 851712
    %28 = vst.msk [vmem:[#allocation0] sm:$0x1] %vm27, %v26
    %s29 = scalar_lea.vmem %s0, 11
    %v30 = vld [vmem:[%s29] sm:$0x1]
    %31 = vrot.lane.b32.xlu0 %v30, 88
    %v32 = vpop.permute.xlu0 %31
    %vm33 = vcmask 786112
    %34 = vst.msk [vmem:[#allocation0] sm:$0x1] %vm33, %v32
    %s35 = scalar_lea.vmem %s0, 10
    %v36 = vld [vmem:[%s35] sm:$0x1]
    %37 = vrot.lane.b32.xlu0 %v36, 80
    %v38 = vpop.permute.xlu0 %37
    %vm39 = vcmask 720512
    %40 = vst.msk [vmem:[#allocation0] sm:$0x1] %vm39, %v38
    %s41 = scalar_lea.vmem %s0, 9
    %v42 = vld [vmem:[%s41] sm:$0x1]
    %43 = vrot.lane.b32.xlu0 %v42, 72
    %v44 = vpop.permute.xlu0 %43
    %vm45 = vcmask 654912
    %46 = vst.msk [vmem:[#allocation0] sm:$0x1] %vm45, %v44
    %s47 = scalar_lea.vmem %s0, 8
    %v48 = vld [vmem:[%s47] sm:$0x1]
    %49 = vrot.lane.b32.xlu0 %v48, 64
    %v50 = vpop.permute.xlu0 %49
    %vm51 = vcmask 589312
    %52 = vst.msk [vmem:[#allocation0] sm:$0x1] %vm51, %v50
    %s53 = scalar_lea.vmem %s0, 7
    %v54 = vld [vmem:[%s53] sm:$0x1]
    %55 = vrot.lane.b32.xlu0 %v54, 56
    %v56 = vpop.permute.xlu0 %55
    %vm57 = vcmask 523712
    %58 = vst.msk [vmem:[#allocation0] sm:$0x1] %vm57, %v56
    %s59 = scalar_lea.vmem %s0, 6
    %v60 = vld [vmem:[%s59] sm:$0x1]
    %61 = vrot.lane.b32.xlu0 %v60, 48
    %v62 = vpop.permute.xlu0 %61
    %vm63 = vcmask 458112
    %64 = vst.msk [vmem:[#allocation0] sm:$0x1] %vm63, %v62
    %s65 = scalar_lea.vmem %s0, 5
    %v66 = vld [vmem:[%s65] sm:$0x1]
    %67 = vrot.lane.b32.xlu0 %v66, 40
    %v68 = vpop.permute.xlu0 %67
    %vm69 = vcmask 392512
    %70 = vst.msk [vmem:[#allocation0] sm:$0x1] %vm69, %v68
    %s71 = scalar_lea.vmem %s0, 4
    %v72 = vld [vmem:[%s71] sm:$0x1]
    %73 = vrot.lane.b32.xlu0 %v72, 32
    %v74 = vpop.permute.xlu0 %73
    %vm75 = vcmask 326912
    %76 = vst.msk [vmem:[#allocation0] sm:$0x1] %vm75, %v74
    %s77 = scalar_lea.vmem %s0, 3
    %v78 = vld [vmem:[%s77] sm:$0x1]
    %79 = vrot.lane.b32.xlu0 %v78, 24
    %v80 = vpop.permute.xlu0 %79
    %vm81 = vcmask 261312
    %82 = vst.msk [vmem:[#allocation0] sm:$0x1] %vm81, %v80
    %s83 = scalar_lea.vmem %s0, 2
    %v84 = vld [vmem:[%s83] sm:$0x1]
    %85 = vrot.lane.b32.xlu0 %v84, 16
    %v86 = vpop.permute.xlu0 %85
    %vm87 = vcmask 195712
    %88 = vst.msk [vmem:[#allocation0] sm:$0x1] %vm87, %v86
    %s89 = scalar_lea.vmem %s0, 1
    %v90 = vld [vmem:[%s89] sm:$0x1]
    %91 = vrot.lane.b32.xlu0 %v90, 8
    %v92 = vpop.permute.xlu0 %91
    %vm93 = vcmask 130112
    %94 = vst.msk [vmem:[#allocation0] sm:$0x1] %vm93, %v92
    %s96 = sshllo.u32 0, 1
    %v98 = vld [vmem:[#allocation0] sm:%s96]
    %s99 = sshllo.u32 0, 1
    %100 = vst [vmem:[%s1] sm:%s99] %v98

// kernel: basic_block.1
$region0: #{basic_block.1}
  #allocation0 [shape = 'u32[]', space=smem, size = 0x4, offset = 0x4, fixed_abs, tag = 'smem constant byte address 0x4 - core index']
  #allocation1 [shape = 'u32[144,128]{1,0:T(1,128)}', space=vmem, size = 0x12000, scoped, tag = 'internal scratch']
  %s0 = inlined_call_operand.vmem [shape: f32[2,16,128], index: 0, kind: input, shape index: {}]
  %s1 = inlined_call_operand.vmem [shape: bf16[384,128], index: 1, kind: input, shape index: {}]
  %s2 = inlined_call_operand.vmem [shape: bf16[384,128], index: 2, kind: input, shape index: {}]
  %s3 = inlined_call_operand.vmem [shape: f32[1,128], index: 3, kind: input, shape index: {}]
  %s4 = inlined_call_operand.vmem [shape: f32[1,128], index: 4, kind: input, shape index: {}]
  %s5 = inlined_call_operand.vmem [shape: f32[1,128], index: 5, kind: input, shape index: {}]
  %s6 = inlined_call_operand.vmem [shape: f32[1,128], index: 6, kind: input, shape index: {}]
  %s7 = inlined_call_operand.vmem [shape: f32[2,16,128], index: 7, kind: output, shape index: {}]
  %s8 = sld [smem:[#allocation0]]
  $region38: #{basic_block.1} parent=0
    _
  %s10 = ssub.s32 1, %s8
  %s11 = scalar_select 0, %s10, %s8
  // Predicated region
  $region2: #{basic_block.1} parent=0 // pred_check
    _
  $region3: #{basic_block.1} parent=0 // pred_check_branch
    %13 = sbr.rel (0) target = $region5
  $region4: #{basic_block.1} parent=0 // pred_region
    _
  $region5: #{basic_block.1} parent=0 // pred_fallthru
    _
  // Predicated region
  $region6: #{basic_block.1} parent=0 // pred_check
    _
  $region7: #{basic_block.1} parent=0 // pred_check_branch
    %15 = sbr.rel (0) target = $region9
  $region8: #{basic_block.1} parent=0 // pred_region
    _
  $region9: #{basic_block.1} parent=0 // pred_fallthru
    _
  // Predicated region
  $region10: #{basic_block.1} parent=0 // pred_check
    _
  $region11: #{basic_block.1} parent=0 // pred_check_branch
    %17 = sbr.rel (0) target = $region13
  $region12: #{basic_block.1} parent=0 // pred_region
    _
  $region13: #{basic_block.1} parent=0 // pred_fallthru
    _
  // Predicated region
  $region14: #{basic_block.1} parent=0 // pred_check
    _
  $region15: #{basic_block.1} parent=0 // pred_check_branch
    %19 = sbr.rel (0) target = $region17
  $region16: #{basic_block.1} parent=0 // pred_region
    _
  $region17: #{basic_block.1} parent=0 // pred_fallthru
    _
  // Predicated region
  $region18: #{basic_block.1} parent=0 // pred_check
    _
  $region19: #{basic_block.1} parent=0 // pred_check_branch
    %21 = sbr.rel (0) target = $region21
  $region20: #{basic_block.1} parent=0 // pred_region
    _
  $region21: #{basic_block.1} parent=0 // pred_fallthru
    _
  // Predicated region
  $region22: #{basic_block.1} parent=0 // pred_check
    _
  $region23: #{basic_block.1} parent=0 // pred_check_branch
    %23 = sbr.rel (0) target = $region25
  $region24: #{basic_block.1} parent=0 // pred_region
    _
  $region25: #{basic_block.1} parent=0 // pred_fallthru
    _
  // Predicated region
  $region26: #{basic_block.1} parent=0 // pred_check
    _
  $region27: #{basic_block.1} parent=0 // pred_check_branch
    %25 = sbr.rel (0) target = $region29
  $region28: #{basic_block.1} parent=0 // pred_region
    _
  $region29: #{basic_block.1} parent=0 // pred_fallthru
    _
  %v27 = vld [vmem:[%s0] sm:$0xff]
  %v28 = vld [vmem:[%s0 + $0x8] sm:$0xff]
  %v29 = vld [vmem:[%s0 + $0x10] sm:$0xff]
  %v30 = vld [vmem:[%s0 + $0x18] sm:$0xff]
  %vm35 = vcmask 1040384
  %v36 = vrot.slane %v27, 7
  %v37 = vrot.slane %v28, 7
  %v38 = vsel %vm35, %v36, %v37
  %v39 = vrot.slane %v29, 7
  %v40 = vrot.slane %v30, 7
  %v41 = vsel %vm35, %v39, %v40
  %v48 = vsel %vm35, 0.0, %v36
  %v49 = vsel %vm35, 0.0, %v39
  %v50 = vsel %vm35, %v37, 0.0
  %v51 = vsel %vm35, %v40, 0.0
  %vm56 = vcmask 1046528
  %v57 = vrot.slane %v48, 1
  %v58 = vrot.slane %v38, 1
  %v59 = vsel %vm56, %v57, %v58
  %v60 = vrot.slane %v50, 1
  %v61 = vsel %vm56, %v58, %v60
  %v62 = vrot.slane %v49, 1
  %v63 = vrot.slane %v41, 1
  %v64 = vsel %vm56, %v62, %v63
  %v65 = vrot.slane %v51, 1
  %v66 = vsel %vm56, %v63, %v65
  %vm71 = vcmask 1045504
  %v72 = vrot.slane %v48, 2
  %v73 = vrot.slane %v38, 2
  %v74 = vsel %vm71, %v72, %v73
  %v75 = vrot.slane %v50, 2
  %v76 = vsel %vm71, %v73, %v75
  %v77 = vrot.slane %v49, 2
  %v78 = vrot.slane %v41, 2
  %v79 = vsel %vm71, %v77, %v78
  %v80 = vrot.slane %v51, 2
  %v81 = vsel %vm71, %v78, %v80
  %v86 = vpack.c.bf16 %v38, %v48
  %v87 = vpack.c.bf16 %v61, %v59
  %v88 = vpack.c.bf16 %v76, %v74
  %v89 = vpack.c.bf16 %v41, %v49
  %v90 = vpack.c.bf16 %v66, %v64
  %v91 = vpack.c.bf16 %v81, %v79
  %v92 = vld [vmem:[%s1] sm:$0xf]
  %v93 = vld [vmem:[%s1 + $0x4] sm:$0xf]
  %v94 = vld [vmem:[%s1 + $0x8] sm:$0xf]
  %v95 = vld [vmem:[%s1 + $0xc] sm:$0xf]
  %v96 = vld [vmem:[%s1 + $0x10] sm:$0xf]
  %v97 = vld [vmem:[%s1 + $0x14] sm:$0xf]
  %v98 = vld [vmem:[%s1 + $0x18] sm:$0xf]
  %v99 = vld [vmem:[%s1 + $0x1c] sm:$0xf]
  %v100 = vld [vmem:[%s1 + $0x20] sm:$0xf]
  %v101 = vld [vmem:[%s1 + $0x24] sm:$0xf]
  %v102 = vld [vmem:[%s1 + $0x28] sm:$0xf]
  %v103 = vld [vmem:[%s1 + $0x2c] sm:$0xf]
  %v104 = vld [vmem:[%s1 + $0x30] sm:$0xf]
  %v105 = vld [vmem:[%s1 + $0x34] sm:$0xf]
  %v106 = vld [vmem:[%s1 + $0x38] sm:$0xf]
  %v107 = vld [vmem:[%s1 + $0x3c] sm:$0xf]
  %v108 = vld [vmem:[%s1 + $0x40] sm:$0xf]
  %v109 = vld [vmem:[%s1 + $0x44] sm:$0xf]
  %v110 = vld [vmem:[%s1 + $0x48] sm:$0xf]
  %v111 = vld [vmem:[%s1 + $0x4c] sm:$0xf]
  %v112 = vld [vmem:[%s1 + $0x50] sm:$0xf]
  %v113 = vld [vmem:[%s1 + $0x54] sm:$0xf]
  %v114 = vld [vmem:[%s1 + $0x58] sm:$0xf]
  %v115 = vld [vmem:[%s1 + $0x5c] sm:$0xf]
  %v116 = vld [vmem:[%s1 + $0x60] sm:$0xf]
  %v117 = vld [vmem:[%s1 + $0x64] sm:$0xf]
  %v118 = vld [vmem:[%s1 + $0x68] sm:$0xf]
  %v119 = vld [vmem:[%s1 + $0x6c] sm:$0xf]
  %v120 = vld [vmem:[%s1 + $0x70] sm:$0xf]
  %v121 = vld [vmem:[%s1 + $0x74] sm:$0xf]
  %v122 = vld [vmem:[%s1 + $0x78] sm:$0xf]
  %v123 = vld [vmem:[%s1 + $0x7c] sm:$0xf]
  %v124 = vld [vmem:[%s1 + $0x80] sm:$0xf]
  %v125 = vld [vmem:[%s1 + $0x84] sm:$0xf]
  %v126 = vld [vmem:[%s1 + $0x88] sm:$0xf]
  %v127 = vld [vmem:[%s1 + $0x8c] sm:$0xf]
  %v128 = vld [vmem:[%s1 + $0x90] sm:$0xf]
  %v129 = vld [vmem:[%s1 + $0x94] sm:$0xf]
  %v130 = vld [vmem:[%s1 + $0x98] sm:$0xf]
  %v131 = vld [vmem:[%s1 + $0x9c] sm:$0xf]
  %v132 = vld [vmem:[%s1 + $0xa0] sm:$0xf]
  %v133 = vld [vmem:[%s1 + $0xa4] sm:$0xf]
  %v134 = vld [vmem:[%s1 + $0xa8] sm:$0xf]
  %v135 = vld [vmem:[%s1 + $0xac] sm:$0xf]
  %v136 = vld [vmem:[%s1 + $0xb0] sm:$0xf]
  %v137 = vld [vmem:[%s1 + $0xb4] sm:$0xf]
  %v138 = vld [vmem:[%s1 + $0xb8] sm:$0xf]
  %v139 = vld [vmem:[%s1 + $0xbc] sm:$0xf]
  %v188 = vunpack.c.l.b16 %v92
  %v189 = vunpack.c.l.b16 %v93
  %v190 = vunpack.c.l.b16 %v94
  %v191 = vunpack.c.l.b16 %v95
  %v192 = vunpack.c.l.b16 %v96
  %v193 = vunpack.c.l.b16 %v97
  %v194 = vunpack.c.l.b16 %v98
  %v195 = vunpack.c.l.b16 %v99
  %v196 = vunpack.c.l.b16 %v100
  %v197 = vunpack.c.l.b16 %v101
  %v198 = vunpack.c.l.b16 %v102
  %v199 = vunpack.c.l.b16 %v103
  %v200 = vunpack.c.l.b16 %v104
  %v201 = vunpack.c.l.b16 %v105
  %v202 = vunpack.c.l.b16 %v106
  %v203 = vunpack.c.l.b16 %v107
  %v204 = vunpack.c.l.b16 %v108
  %v205 = vunpack.c.l.b16 %v109
  %v206 = vunpack.c.l.b16 %v110
  %v207 = vunpack.c.l.b16 %v111
  %v208 = vunpack.c.l.b16 %v112
  %v209 = vunpack.c.l.b16 %v113
  %v210 = vunpack.c.l.b16 %v114
  %v211 = vunpack.c.l.b16 %v115
  %v212 = vunpack.c.l.b16 %v116
  %v213 = vunpack.c.l.b16 %v117
  %v214 = vunpack.c.l.b16 %v118
  %v215 = vunpack.c.l.b16 %v119
  %v216 = vunpack.c.l.b16 %v120
  %v217 = vunpack.c.l.b16 %v121
  %v218 = vunpack.c.l.b16 %v122
  %v219 = vunpack.c.l.b16 %v123
  %v220 = vunpack.c.l.b16 %v124
  %v221 = vunpack.c.l.b16 %v125
  %v222 = vunpack.c.l.b16 %v126
  %v223 = vunpack.c.l.b16 %v127
  %v224 = vunpack.c.l.b16 %v128
  %v225 = vunpack.c.l.b16 %v129
  %v226 = vunpack.c.l.b16 %v130
  %v227 = vunpack.c.l.b16 %v131
  %v228 = vunpack.c.l.b16 %v132
  %v229 = vunpack.c.l.b16 %v133
  %v230 = vunpack.c.l.b16 %v134
  %v231 = vunpack.c.l.b16 %v135
  %v232 = vunpack.c.l.b16 %v136
  %v233 = vunpack.c.l.b16 %v137
  %v234 = vunpack.c.l.b16 %v138
  %v235 = vunpack.c.l.b16 %v139
  %v236 = vpack.c.b16 %v189, %v188
  %v237 = vpack.c.b16 %v191, %v190
  %v238 = vpack.c.b16 %v193, %v192
  %v239 = vpack.c.b16 %v195, %v194
  %v240 = vpack.c.b16 %v197, %v196
  %v241 = vpack.c.b16 %v199, %v198
  %v242 = vpack.c.b16 %v201, %v200
  %v243 = vpack.c.b16 %v203, %v202
  %v244 = vpack.c.b16 %v205, %v204
  %v245 = vpack.c.b16 %v207, %v206
  %v246 = vpack.c.b16 %v209, %v208
  %v247 = vpack.c.b16 %v211, %v210
  %v248 = vpack.c.b16 %v213, %v212
  %v249 = vpack.c.b16 %v215, %v214
  %v250 = vpack.c.b16 %v217, %v216
  %v251 = vpack.c.b16 %v219, %v218
  %v252 = vpack.c.b16 %v221, %v220
  %v253 = vpack.c.b16 %v223, %v222
  %v254 = vpack.c.b16 %v225, %v224
  %v255 = vpack.c.b16 %v227, %v226
  %v256 = vpack.c.b16 %v229, %v228
  %v257 = vpack.c.b16 %v231, %v230
  %v258 = vpack.c.b16 %v233, %v232
  %v259 = vpack.c.b16 %v235, %v234
  %284 = vmatprep.subr.bf16.mxu0 0
  %285 = vmatpush1.bf16.msra.mxu0 %v236
  %286 = vmatprep.subr.bf16.mxu0 0
  %287 = vmatpush1.bf16.msra.mxu0 %v237
  %288 = vmatprep.subr.bf16.mxu0 0
  %289 = vmatpush1.bf16.msra.mxu0 %v238
  %290 = vmatprep.subr.bf16.mxu0 0
  %291 = vmatpush1.bf16.msra.mxu0 %v239
  %292 = vmatprep.subr.bf16.mxu0 0
  %293 = vmatpush1.bf16.msra.mxu0 %v240
  %294 = vmatprep.subr.bf16.mxu0 0
  %295 = vmatpush1.bf16.msra.mxu0 %v241
  %296 = vmatprep.subr.bf16.mxu0 0
  %297 = vmatpush1.bf16.msra.mxu0 %v242
  %298 = vmatprep.subr.bf16.mxu0 0
  %299 = vmatpush1.bf16.msra.mxu0 %v243
  %300 = vmatprep.subr.bf16.mxu0 0
  %301 = vmatpush1.bf16.msra.mxu0 %v244
  %302 = vmatprep.subr.bf16.mxu0 0
  %303 = vmatpush1.bf16.msra.mxu0 %v245
  %304 = vmatprep.subr.bf16.mxu0 0
  %305 = vmatpush1.bf16.msra.mxu0 %v246
  %306 = vmatprep.subr.bf16.mxu0 0
  %307 = vmatpush1.bf16.msra.mxu0 %v247
  %308 = vmatprep.subr.bf16.mxu0 0
  %309 = vmatpush1.bf16.msra.mxu0 %v248
  %310 = vmatprep.subr.bf16.mxu0 0
  %311 = vmatpush1.bf16.msra.mxu0 %v249
  %312 = vmatprep.subr.bf16.mxu0 0
  %313 = vmatpush1.bf16.msra.mxu0 %v250
  %314 = vmatprep.subr.bf16.mxu0 0
  %315 = vmatpush1.bf16.msra.mxu0 %v251
  %316 = vmatprep.mubr.bf16.mxu0 %v87
  %317 = vmatmul.mubr.bf16.gmra.mrb[0].mxu0 %v86
  %v318 = vpop.f32.mrb[0].mxu0
  %v319 = vadd.f32 0.0, %v318
  %v320 = vpop.f32.mrb[0].mxu0
  %v321 = vpop.f32.mrb[0].mxu0
  %v322 = vadd.f32 0.0, %v321
  %v323 = vpop.f32.mrb[0].mxu0
  %324 = vmatprep.mubr.bf16.mxu0 %v90
  %325 = vmatmul.mubr.bf16.gmra.mrb[0].mxu0 %v89
  %v326 = vpop.f32.mrb[0].mxu0
  %v327 = vadd.f32 0.0, %v326
  %v328 = vpop.f32.mrb[0].mxu0
  %v329 = vpop.f32.mrb[0].mxu0
  %v330 = vadd.f32 0.0, %v329
  %v331 = vpop.f32.mrb[0].mxu0
  %332 = vdwg.mxu0
  %333 = vmatprep.subr.bf16.mxu0 0
  %334 = vmatpush1.bf16.msra.mxu0 %v252
  %335 = vmatprep.subr.bf16.mxu0 0
  %336 = vmatpush1.bf16.msra.mxu0 %v253
  %337 = vmatprep.subr.bf16.mxu0 0
  %338 = vmatpush1.bf16.msra.mxu0 %v254
  %339 = vmatprep.subr.bf16.mxu0 0
  %340 = vmatpush1.bf16.msra.mxu0 %v255
  %341 = vmatprep.subr.bf16.mxu0 0
  %342 = vmatpush1.bf16.msra.mxu0 %v256
  %343 = vmatprep.subr.bf16.mxu0 0
  %344 = vmatpush1.bf16.msra.mxu0 %v257
  %345 = vmatprep.subr.bf16.mxu0 0
  %346 = vmatpush1.bf16.msra.mxu0 %v258
  %347 = vmatprep.subr.bf16.mxu0 0
  %348 = vmatpush1.bf16.msra.mxu0 %v259
  %349 = vmatprep.subr.bf16.mxu0 0
  %350 = vmatpush1.bf16.msra.mxu0 0
  %351 = vmatprep.subr.bf16.mxu0 0
  %352 = vmatpush1.bf16.msra.mxu0 0
  %353 = vmatprep.subr.bf16.mxu0 0
  %354 = vmatpush1.bf16.msra.mxu0 0
  %355 = vmatprep.subr.bf16.mxu0 0
  %356 = vmatpush1.bf16.msra.mxu0 0
  %357 = vmatprep.subr.bf16.mxu0 0
  %358 = vmatpush1.bf16.msra.mxu0 0
  %359 = vmatprep.subr.bf16.mxu0 0
  %360 = vmatpush1.bf16.msra.mxu0 0
  %361 = vmatprep.subr.bf16.mxu0 0
  %362 = vmatpush1.bf16.msra.mxu0 0
  %363 = vmatprep.subr.bf16.mxu0 0
  %364 = vmatpush1.bf16.msra.mxu0 0
  %365 = vmatprep.mubr.bf16.mxu0 0
  %366 = vmatmul.mubr.bf16.gmra.mrb[0].mxu0 %v88
  %v367 = vpop.f32.mrb[0].mxu0
  %v368 = vadd.f32 %v319, %v367
  %v369 = vpop.f32.mrb[0].mxu0
  %v370 = vpop.f32.mrb[0].mxu0
  %v371 = vadd.f32 %v322, %v370
  %v372 = vpop.f32.mrb[0].mxu0
  %373 = vmatprep.mubr.bf16.mxu0 0
  %374 = vmatmul.mubr.bf16.gmra.mrb[0].mxu0 %v91
  %v375 = vpop.f32.mrb[0].mxu0
  %v376 = vadd.f32 %v327, %v375
  %v377 = vpop.f32.mrb[0].mxu0
  %v378 = vpop.f32.mrb[0].mxu0
  %v379 = vadd.f32 %v330, %v378
  %v380 = vpop.f32.mrb[0].mxu0
  %381 = vdwg.mxu0
  %v382 = vld [vmem:[%s3] sm:$0x1]
  %v383 = vld [vmem:[%s4] sm:$0x1]
  %v384 = vadd.f32 %v368, %v371
  %v385 = vadd.f32 %v384, %v376
  %v386 = vadd.f32 %v385, %v379
  %v387 = vrot.slane %v386, 4
  %v388 = vadd.f32 %v386, %v387
  %v389 = vrot.slane %v388, 2
  %v390 = vadd.f32 %v388, %v389
  %v391 = vrot.slane %v390, 1
  %v392 = vadd.f32 %v390, %v391
  %v393 = vmul.f32 %v368, %v368
  %v394 = vmul.f32 %v371, %v371
  %v395 = vmul.f32 %v376, %v376
  %v396 = vmul.f32 %v379, %v379
  %v397 = vadd.f32 %v393, %v394
  %v398 = vadd.f32 %v397, %v395
  %v399 = vadd.f32 %v398, %v396
  %v400 = vrot.slane %v399, 4
  %v401 = vadd.f32 %v399, %v400
  %v402 = vrot.slane %v401, 2
  %v403 = vadd.f32 %v401, %v402
  %v404 = vrot.slane %v403, 1
  %v405 = vadd.f32 %v403, %v404
  %v406 = vsel %vm35, %v392, %v405
  %407 = vrot.lane.b32.xlu0 %v406, 8
  %v408 = vpop.permute.xlu0 %407
  %v409 = vadd.f32 %v406, %v408
  %410 = vrot.lane.b32.xlu0 %v409, 16
  %v411 = vpop.permute.xlu0 %410
  %v412 = vadd.f32 %v409, %v411
  %413 = vrot.lane.b32.xlu0 %v412, 32
  %v414 = vpop.permute.xlu0 %413
  %v415 = vadd.f32 %v412, %v414
  %416 = vrot.lane.b32.xlu0 %v415, 64
  %v417 = vpop.permute.xlu0 %416
  %v418 = vadd.f32 %v415, %v417
  %v419 = vrcp.pop 512.0
  %v420 = vmul.f32 %v418, %v419
  %v421 = vmul.f32 %v420, %v420
  %v423 = vrot.slane %v421, 7
  %v425 = vsub.f32 %v420, %v423
  %v426 = vmax.f32 %v425, 0.0
  %v427 = vadd.f32 %v426, 1e-05
  %v428 = vrsqrt.pop %v427
  %v431 = vunpack.c.l.s4 1966171168
  %v432 = vunpack.c.0.s8 %v431
  %v433 = vlaneseq
  %v434 = vshrl.u32 %v433, 7
  %v435 = vsub.s32 %v432, %v434
  %v436 = vrot.slane %v428, %v435
  %v437 = vcombine.high %v436, %v436
  %v439 = vunpack.c.l.s4 1966171168
  %v440 = vunpack.c.0.s8 %v439
  %v441 = vlaneseq
  %v442 = vshrl.u32 %v441, 7
  %v443 = vsub.s32 %v440, %v442
  %v444 = vrot.slane %v437, %v443
  %v446 = vmul.f32 %v382, %v444
  %v447 = vmul.f32 %v420, %v446
  %v448 = vsub.f32 %v383, %v447
  %v450 = vlaneseq
  %v451 = vshrl.u32 %v450, 7
  %v452 = vsub.s32 0, %v451
  %v453 = vrot.slane %v446, %v452
  %v455 = vmul.f32 %v368, %v453
  %v456 = vmul.f32 %v371, %v453
  %v457 = vmul.f32 %v376, %v453
  %v458 = vmul.f32 %v379, %v453
  %v460 = vlaneseq
  %v461 = vshrl.u32 %v460, 7
  %v462 = vsub.s32 0, %v461
  %v463 = vrot.slane %v448, %v462
  %v465 = vadd.f32 %v455, %v463
  %v466 = vadd.f32 %v456, %v463
  %v467 = vadd.f32 %v457, %v463
  %v468 = vadd.f32 %v458, %v463
  %v469 = vmax.f32 %v465, 0.0
  %v470 = vmax.f32 %v466, 0.0
  %v471 = vmax.f32 %v467, 0.0
  %v472 = vmax.f32 %v468, 0.0
  %v477 = vrot.slane %v469, 7
  %v478 = vrot.slane %v470, 7
  %v479 = vsel %vm35, %v477, %v478
  %v480 = vrot.slane %v471, 7
  %v481 = vrot.slane %v472, 7
  %v482 = vsel %vm35, %v480, %v481
  %v489 = vsel %vm35, 0.0, %v477
  %v490 = vsel %vm35, 0.0, %v480
  %v491 = vsel %vm35, %v478, 0.0
  %v492 = vsel %vm35, %v481, 0.0
  %v497 = vrot.slane %v489, 1
  %v498 = vrot.slane %v479, 1
  %v499 = vsel %vm56, %v497, %v498
  %v500 = vrot.slane %v491, 1
  %v501 = vsel %vm56, %v498, %v500
  %v502 = vrot.slane %v490, 1
  %v503 = vrot.slane %v482, 1
  %v504 = vsel %vm56, %v502, %v503
  %v505 = vrot.slane %v492, 1
  %v506 = vsel %vm56, %v503, %v505
  %v511 = vrot.slane %v489, 2
  %v512 = vrot.slane %v479, 2
  %v513 = vsel %vm71, %v511, %v512
  %v514 = vrot.slane %v491, 2
  %v515 = vsel %vm71, %v512, %v514
  %v516 = vrot.slane %v490, 2
  %v517 = vrot.slane %v482, 2
  %v518 = vsel %vm71, %v516, %v517
  %v519 = vrot.slane %v492, 2
  %v520 = vsel %vm71, %v517, %v519
  %v525 = vpack.c.bf16 %v479, %v489
  %v526 = vpack.c.bf16 %v501, %v499
  %v527 = vpack.c.bf16 %v515, %v513
  %v528 = vpack.c.bf16 %v482, %v490
  %v529 = vpack.c.bf16 %v506, %v504
  %v530 = vpack.c.bf16 %v520, %v518
  %v531 = vld [vmem:[%s2] sm:$0xf]
  %v532 = vld [vmem:[%s2 + $0x4] sm:$0xf]
  %v533 = vld [vmem:[%s2 + $0x8] sm:$0xf]
  %v534 = vld [vmem:[%s2 + $0xc] sm:$0xf]
  %v535 = vld [vmem:[%s2 + $0x10] sm:$0xf]
  %v536 = vld [vmem:[%s2 + $0x14] sm:$0xf]
  %v537 = vld [vmem:[%s2 + $0x18] sm:$0xf]
  %v538 = vld [vmem:[%s2 + $0x1c] sm:$0xf]
  %v539 = vld [vmem:[%s2 + $0x20] sm:$0xf]
  %v540 = vld [vmem:[%s2 + $0x24] sm:$0xf]
  %v541 = vld [vmem:[%s2 + $0x28] sm:$0xf]
  %v542 = vld [vmem:[%s2 + $0x2c] sm:$0xf]
  %v543 = vld [vmem:[%s2 + $0x30] sm:$0xf]
  %v544 = vld [vmem:[%s2 + $0x34] sm:$0xf]
  %v545 = vld [vmem:[%s2 + $0x38] sm:$0xf]
  %v546 = vld [vmem:[%s2 + $0x3c] sm:$0xf]
  %v547 = vld [vmem:[%s2 + $0x40] sm:$0xf]
  %v548 = vld [vmem:[%s2 + $0x44] sm:$0xf]
  %v549 = vld [vmem:[%s2 + $0x48] sm:$0xf]
  %v550 = vld [vmem:[%s2 + $0x4c] sm:$0xf]
  %v551 = vld [vmem:[%s2 + $0x50] sm:$0xf]
  %v552 = vld [vmem:[%s2 + $0x54] sm:$0xf]
  %v553 = vld [vmem:[%s2 + $0x58] sm:$0xf]
  %v554 = vld [vmem:[%s2 + $0x5c] sm:$0xf]
  %v555 = vld [vmem:[%s2 + $0x60] sm:$0xf]
  %v556 = vld [vmem:[%s2 + $0x64] sm:$0xf]
  %v557 = vld [vmem:[%s2 + $0x68] sm:$0xf]
  %v558 = vld [vmem:[%s2 + $0x6c] sm:$0xf]
  %v559 = vld [vmem:[%s2 + $0x70] sm:$0xf]
  %v560 = vld [vmem:[%s2 + $0x74] sm:$0xf]
  %v561 = vld [vmem:[%s2 + $0x78] sm:$0xf]
  %v562 = vld [vmem:[%s2 + $0x7c] sm:$0xf]
  %v563 = vld [vmem:[%s2 + $0x80] sm:$0xf]
  %v564 = vld [vmem:[%s2 + $0x84] sm:$0xf]
  %v565 = vld [vmem:[%s2 + $0x88] sm:$0xf]
  %v566 = vld [vmem:[%s2 + $0x8c] sm:$0xf]
  %v567 = vld [vmem:[%s2 + $0x90] sm:$0xf]
  %v568 = vld [vmem:[%s2 + $0x94] sm:$0xf]
  %v569 = vld [vmem:[%s2 + $0x98] sm:$0xf]
  %v570 = vld [vmem:[%s2 + $0x9c] sm:$0xf]
  %v571 = vld [vmem:[%s2 + $0xa0] sm:$0xf]
  %v572 = vld [vmem:[%s2 + $0xa4] sm:$0xf]
  %v573 = vld [vmem:[%s2 + $0xa8] sm:$0xf]
  %v574 = vld [vmem:[%s2 + $0xac] sm:$0xf]
  %v575 = vld [vmem:[%s2 + $0xb0] sm:$0xf]
  %v576 = vld [vmem:[%s2 + $0xb4] sm:$0xf]
  %v577 = vld [vmem:[%s2 + $0xb8] sm:$0xf]
  %v578 = vld [vmem:[%s2 + $0xbc] sm:$0xf]
  %v627 = vunpack.c.l.b16 %v531
  %v628 = vunpack.c.l.b16 %v532
  %v629 = vunpack.c.l.b16 %v533
  %v630 = vunpack.c.l.b16 %v534
  %v631 = vunpack.c.l.b16 %v535
  %v632 = vunpack.c.l.b16 %v536
  %v633 = vunpack.c.l.b16 %v537
  %v634 = vunpack.c.l.b16 %v538
  %v635 = vunpack.c.l.b16 %v539
  %v636 = vunpack.c.l.b16 %v540
  %v637 = vunpack.c.l.b16 %v541
  %v638 = vunpack.c.l.b16 %v542
  %v639 = vunpack.c.l.b16 %v543
  %v640 = vunpack.c.l.b16 %v544
  %v641 = vunpack.c.l.b16 %v545
  %v642 = vunpack.c.l.b16 %v546
  %v643 = vunpack.c.l.b16 %v547
  %v644 = vunpack.c.l.b16 %v548
  %v645 = vunpack.c.l.b16 %v549
  %v646 = vunpack.c.l.b16 %v550
  %v647 = vunpack.c.l.b16 %v551
  %v648 = vunpack.c.l.b16 %v552
  %v649 = vunpack.c.l.b16 %v553
  %v650 = vunpack.c.l.b16 %v554
  %v651 = vunpack.c.l.b16 %v555
  %v652 = vunpack.c.l.b16 %v556
  %v653 = vunpack.c.l.b16 %v557
  %v654 = vunpack.c.l.b16 %v558
  %v655 = vunpack.c.l.b16 %v559
  %v656 = vunpack.c.l.b16 %v560
  %v657 = vunpack.c.l.b16 %v561
  %v658 = vunpack.c.l.b16 %v562
  %v659 = vunpack.c.l.b16 %v563
  %v660 = vunpack.c.l.b16 %v564
  %v661 = vunpack.c.l.b16 %v565
  %v662 = vunpack.c.l.b16 %v566
  %v663 = vunpack.c.l.b16 %v567
  %v664 = vunpack.c.l.b16 %v568
  %v665 = vunpack.c.l.b16 %v569
  %v666 = vunpack.c.l.b16 %v570
  %v667 = vunpack.c.l.b16 %v571
  %v668 = vunpack.c.l.b16 %v572
  %v669 = vunpack.c.l.b16 %v573
  %v670 = vunpack.c.l.b16 %v574
  %v671 = vunpack.c.l.b16 %v575
  %v672 = vunpack.c.l.b16 %v576
  %v673 = vunpack.c.l.b16 %v577
  %v674 = vunpack.c.l.b16 %v578
  %v675 = vpack.c.b16 %v628, %v627
  %v676 = vpack.c.b16 %v630, %v629
  %v677 = vpack.c.b16 %v632, %v631
  %v678 = vpack.c.b16 %v634, %v633
  %v679 = vpack.c.b16 %v636, %v635
  %v680 = vpack.c.b16 %v638, %v637
  %v681 = vpack.c.b16 %v640, %v639
  %v682 = vpack.c.b16 %v642, %v641
  %v683 = vpack.c.b16 %v644, %v643
  %v684 = vpack.c.b16 %v646, %v645
  %v685 = vpack.c.b16 %v648, %v647
  %v686 = vpack.c.b16 %v650, %v649
  %v687 = vpack.c.b16 %v652, %v651
  %v688 = vpack.c.b16 %v654, %v653
  %v689 = vpack.c.b16 %v656, %v655
  %v690 = vpack.c.b16 %v658, %v657
  %v691 = vpack.c.b16 %v660, %v659
  %v692 = vpack.c.b16 %v662, %v661
  %v693 = vpack.c.b16 %v664, %v663
  %v694 = vpack.c.b16 %v666, %v665
  %v695 = vpack.c.b16 %v668, %v667
  %v696 = vpack.c.b16 %v670, %v669
  %v697 = vpack.c.b16 %v672, %v671
  %v698 = vpack.c.b16 %v674, %v673
  %723 = vmatprep.subr.bf16.mxu0 0
  %724 = vmatpush1.bf16.msra.mxu0 %v675
  %725 = vmatprep.subr.bf16.mxu0 0
  %726 = vmatpush1.bf16.msra.mxu0 %v676
  %727 = vmatprep.subr.bf16.mxu0 0
  %728 = vmatpush1.bf16.msra.mxu0 %v677
  %729 = vmatprep.subr.bf16.mxu0 0
  %730 = vmatpush1.bf16.msra.mxu0 %v678
  %731 = vmatprep.subr.bf16.mxu0 0
  %732 = vmatpush1.bf16.msra.mxu0 %v679
  %733 = vmatprep.subr.bf16.mxu0 0
  %734 = vmatpush1.bf16.msra.mxu0 %v680
  %735 = vmatprep.subr.bf16.mxu0 0
  %736 = vmatpush1.bf16.msra.mxu0 %v681
  %737 = vmatprep.subr.bf16.mxu0 0
  %738 = vmatpush1.bf16.msra.mxu0 %v682
  %739 = vmatprep.subr.bf16.mxu0 0
  %740 = vmatpush1.bf16.msra.mxu0 %v683
  %741 = vmatprep.subr.bf16.mxu0 0
  %742 = vmatpush1.bf16.msra.mxu0 %v684
  %743 = vmatprep.subr.bf16.mxu0 0
  %744 = vmatpush1.bf16.msra.mxu0 %v685
  %745 = vmatprep.subr.bf16.mxu0 0
  %746 = vmatpush1.bf16.msra.mxu0 %v686
  %747 = vmatprep.subr.bf16.mxu0 0
  %748 = vmatpush1.bf16.msra.mxu0 %v687
  %749 = vmatprep.subr.bf16.mxu0 0
  %750 = vmatpush1.bf16.msra.mxu0 %v688
  %751 = vmatprep.subr.bf16.mxu0 0
  %752 = vmatpush1.bf16.msra.mxu0 %v689
  %753 = vmatprep.subr.bf16.mxu0 0
  %754 = vmatpush1.bf16.msra.mxu0 %v690
  %755 = vmatprep.mubr.bf16.mxu0 %v526
  %756 = vmatmul.mubr.bf16.gmra.mrb[0].mxu0 %v525
  %v757 = vpop.f32.mrb[0].mxu0
  %v758 = vadd.f32 0.0, %v757
  %v759 = vpop.f32.mrb[0].mxu0
  %v760 = vpop.f32.mrb[0].mxu0
  %v761 = vadd.f32 0.0, %v760
  %v762 = vpop.f32.mrb[0].mxu0
  %763 = vmatprep.mubr.bf16.mxu0 %v529
  %764 = vmatmul.mubr.bf16.gmra.mrb[0].mxu0 %v528
  %v765 = vpop.f32.mrb[0].mxu0
  %v766 = vadd.f32 0.0, %v765
  %v767 = vpop.f32.mrb[0].mxu0
  %v768 = vpop.f32.mrb[0].mxu0
  %v769 = vadd.f32 0.0, %v768
  %v770 = vpop.f32.mrb[0].mxu0
  %771 = vdwg.mxu0
  %772 = vmatprep.subr.bf16.mxu0 0
  %773 = vmatpush1.bf16.msra.mxu0 %v691
  %774 = vmatprep.subr.bf16.mxu0 0
  %775 = vmatpush1.bf16.msra.mxu0 %v692
  %776 = vmatprep.subr.bf16.mxu0 0
  %777 = vmatpush1.bf16.msra.mxu0 %v693
  %778 = vmatprep.subr.bf16.mxu0 0
  %779 = vmatpush1.bf16.msra.mxu0 %v694
  %780 = vmatprep.subr.bf16.mxu0 0
  %781 = vmatpush1.bf16.msra.mxu0 %v695
  %782 = vmatprep.subr.bf16.mxu0 0
  %783 = vmatpush1.bf16.msra.mxu0 %v696
  %784 = vmatprep.subr.bf16.mxu0 0
  %785 = vmatpush1.bf16.msra.mxu0 %v697
  %786 = vmatprep.subr.bf16.mxu0 0
  %787 = vmatpush1.bf16.msra.mxu0 %v698
  %788 = vmatprep.subr.bf16.mxu0 0
  %789 = vmatpush1.bf16.msra.mxu0 0
  %790 = vmatprep.subr.bf16.mxu0 0
  %791 = vmatpush1.bf16.msra.mxu0 0
  %792 = vmatprep.subr.bf16.mxu0 0
  %793 = vmatpush1.bf16.msra.mxu0 0
  %794 = vmatprep.subr.bf16.mxu0 0
  %795 = vmatpush1.bf16.msra.mxu0 0
  %796 = vmatprep.subr.bf16.mxu0 0
  %797 = vmatpush1.bf16.msra.mxu0 0
  %798 = vmatprep.subr.bf16.mxu0 0
  %799 = vmatpush1.bf16.msra.mxu0 0
  %800 = vmatprep.subr.bf16.mxu0 0
  %801 = vmatpush1.bf16.msra.mxu0 0
  %802 = vmatprep.subr.bf16.mxu0 0
  %803 = vmatpush1.bf16.msra.mxu0 0
  %804 = vmatprep.mubr.bf16.mxu0 0
  %805 = vmatmul.mubr.bf16.gmra.mrb[0].mxu0 %v527
  %v806 = vpop.f32.mrb[0].mxu0
  %v807 = vadd.f32 %v758, %v806
  %v808 = vpop.f32.mrb[0].mxu0
  %v809 = vpop.f32.mrb[0].mxu0
  %v810 = vadd.f32 %v761, %v809
  %v811 = vpop.f32.mrb[0].mxu0
  %812 = vmatprep.mubr.bf16.mxu0 0
  %813 = vmatmul.mubr.bf16.gmra.mrb[0].mxu0 %v530
  %v814 = vpop.f32.mrb[0].mxu0
  %v815 = vadd.f32 %v766, %v814
  %v816 = vpop.f32.mrb[0].mxu0
  %v817 = vpop.f32.mrb[0].mxu0
  %v818 = vadd.f32 %v769, %v817
  %v819 = vpop.f32.mrb[0].mxu0
  %820 = vdwg.mxu0
  %v821 = vld [vmem:[%s5] sm:$0x1]
  %v822 = vld [vmem:[%s6] sm:$0x1]
  %v823 = vadd.f32 %v807, %v810
  %v824 = vadd.f32 %v823, %v815
  %v825 = vadd.f32 %v824, %v818
  %v826 = vrot.slane %v825, 4
  %v827 = vadd.f32 %v825, %v826
  %v828 = vrot.slane %v827, 2
  %v829 = vadd.f32 %v827, %v828
  %v830 = vrot.slane %v829, 1
  %v831 = vadd.f32 %v829, %v830
  %v832 = vmul.f32 %v807, %v807
  %v833 = vmul.f32 %v810, %v810
  %v834 = vmul.f32 %v815, %v815
  %v835 = vmul.f32 %v818, %v818
  %v836 = vadd.f32 %v832, %v833
  %v837 = vadd.f32 %v836, %v834
  %v838 = vadd.f32 %v837, %v835
  %v839 = vrot.slane %v838, 4
  %v840 = vadd.f32 %v838, %v839
  %v841 = vrot.slane %v840, 2
  %v842 = vadd.f32 %v840, %v841
  %v843 = vrot.slane %v842, 1
  %v844 = vadd.f32 %v842, %v843
  %v845 = vsel %vm35, %v831, %v844
  %846 = vrot.lane.b32.xlu0 %v845, 8
  %v847 = vpop.permute.xlu0 %846
  %v848 = vadd.f32 %v845, %v847
  %849 = vrot.lane.b32.xlu0 %v848, 16
  %v850 = vpop.permute.xlu0 %849
  %v851 = vadd.f32 %v848, %v850
  %852 = vrot.lane.b32.xlu0 %v851, 32
  %v853 = vpop.permute.xlu0 %852
  %v854 = vadd.f32 %v851, %v853
  %855 = vrot.lane.b32.xlu0 %v854, 64
  %v856 = vpop.permute.xlu0 %855
  %v857 = vadd.f32 %v854, %v856
  %v858 = vmul.f32 %v857, %v419
  %v859 = vmul.f32 %v858, %v858
  %v861 = vrot.slane %v859, 7
  %v863 = vsub.f32 %v858, %v861
  %v864 = vmax.f32 %v863, 0.0
  %v865 = vadd.f32 %v864, 1e-05
  %v866 = vrsqrt.pop %v865
  %v869 = vunpack.c.l.s4 1966171168
  %v870 = vunpack.c.0.s8 %v869
  %v871 = vlaneseq
  %v872 = vshrl.u32 %v871, 7
  %v873 = vsub.s32 %v870, %v872
  %v874 = vrot.slane %v866, %v873
  %v875 = vcombine.high %v874, %v874
  %v877 = vunpack.c.l.s4 1966171168
  %v878 = vunpack.c.0.s8 %v877
  %v879 = vlaneseq
  %v880 = vshrl.u32 %v879, 7
  %v881 = vsub.s32 %v878, %v880
  %v882 = vrot.slane %v875, %v881
  %v884 = vmul.f32 %v821, %v882
  %v885 = vmul.f32 %v858, %v884
  %v886 = vsub.f32 %v822, %v885
  %v888 = vlaneseq
  %v889 = vshrl.u32 %v888, 7
  %v890 = vsub.s32 0, %v889
  %v891 = vrot.slane %v884, %v890
  %v893 = vmul.f32 %v807, %v891
  %v894 = vmul.f32 %v810, %v891
  %v895 = vmul.f32 %v815, %v891
  %v896 = vmul.f32 %v818, %v891
  %v898 = vlaneseq
  %v899 = vshrl.u32 %v898, 7
  %v900 = vsub.s32 0, %v899
  %v901 = vrot.slane %v886, %v900
  %v903 = vadd.f32 %v893, %v901
  %v904 = vadd.f32 %v894, %v901
  %v905 = vadd.f32 %v895, %v901
  %v906 = vadd.f32 %v896, %v901
  %v907 = vadd.f32 %v903, %v27
  %v908 = vadd.f32 %v904, %v28
  %v909 = vadd.f32 %v905, %v29
  %v910 = vadd.f32 %v906, %v30
  %v911 = vmax.f32 %v907, 0.0
  %v912 = vmax.f32 %v908, 0.0
  %v913 = vmax.f32 %v909, 0.0
  %v914 = vmax.f32 %v910, 0.0
  %915 = vst [vmem:[%s7] sm:$0xff] %v911
  %916 = vst [vmem:[%s7 + $0x8] sm:$0xff] %v912
  %917 = vst [vmem:[%s7 + $0x10] sm:$0xff] %v913
  %918 = vst [vmem:[%s7 + $0x18] sm:$0xff] %v914
  // Predicated region
  $region30: #{basic_block.1} parent=0 // pred_check
    _
  $region31: #{basic_block.1} parent=0 // pred_check_branch
    %920 = sbr.rel (0) target = $region33
  $region32: #{basic_block.1} parent=0 // pred_region
    _
  $region33: #{basic_block.1} parent=0 // pred_fallthru
    _
  // Predicated region
  $region34: #{basic_block.1} parent=0 // pred_check
    _
  $region35: #{basic_block.1} parent=0 // pred_check_branch
    %922 = sbr.rel (0) target = $region37
  $region36: #{basic_block.1} parent=0 // pred_region
    _
  $region37: #{basic_block.1} parent=0 // pred_fallthru
    _

</llo_original>
